<compile_context>
chip_gen: v5e
topology: v5e:2x2
jax: 0.10.0
libtpu: 0.0.40
codegen_flags: <defaults>
</compile_context>

<pallas_src>
import functools

import jax
import jax.numpy as jnp
from jax import lax
from jax.experimental import pallas as pl
from jax.experimental.pallas import tpu as pltpu

COMMITMENT_COST = 0.25
EPSILON = 1e-5  # only used by the (unimplemented) training-mode EMA update


def _round_up(x, m):
    return (x + m - 1) // m * m


def _vmem_limit_bytes(tm, d_pad, k_pad):
    # double-buffered streaming blocks (x, q, idx, stat partials) +
    # resident codebook/e2 (double-buffered by the auto-pipeliner) +
    # headroom for the [TM, K_pad] temporaries the compiler keeps in VMEM.
    stream = 2 * 4 * (2 * tm * d_pad + tm * 128 + 128 + k_pad)
    resident = 2 * 4 * (k_pad * d_pad + k_pad)
    temps = 6 * 4 * tm * k_pad
    need = stream + resident + temps + (4 << 20)
    # 40 MiB is safe on v7x (64 MiB physical VMEM); bump toward ~96 MiB on
    # v5e/v6e (128 MiB) if block_m is raised for large codebooks.
    return int(min(max(need, 16 << 20), 40 << 20))


def _vq_kernel(x_ref, emb_ref, e2_ref, q_ref, idx_ref, sq_ref, cnt_ref, *,
               m_true, block_m, use_bf16_distances):
    """One M-tile of the VQ forward.

    x_ref  : [TM, Dp]      f32  flattened NHWC inputs (zero-padded)
    emb_ref: [Kp, Dp]      f32  codebook (zero-padded), VMEM-resident
    e2_ref : [1, Kp]       f32  per-code squared norms (huge for padded codes)
    q_ref  : [TM, Dp]      f32  quantized rows (output)
    idx_ref: [TM, 128]     i32  argmin indices, broadcast across lanes (output)
    sq_ref : [1, 1, 128]   f32  per-tile sum of squared errors (partial)
    cnt_ref: [1, 1, Kp]    f32  per-tile one-hot column sums (partial)
    """
    i = pl.program_id(0)
    x = x_ref[...]                                                   # [TM, Dp]
    e = emb_ref[...]                                                 # [Kp, Dp]
    e2 = e2_ref[...]                                                 # [1, Kp]

    tm = x.shape[0]
    k_pad = e.shape[0]

    # x @ e^T on the MXU, contracting D directly (no transpose materialized).
    if use_bf16_distances:
        xe = lax.dot_general(x.astype(jnp.bfloat16), e.astype(jnp.bfloat16),
                             (((1,), (1,)), ((), ())),
                             preferred_element_type=jnp.float32)     # [TM, Kp]
    else:
        xe = lax.dot_general(x, e, (((1,), (1,)), ((), ())),
                             preferred_element_type=jnp.float32)     # [TM, Kp]

    # ||x||^2 per row is constant over codes -> omitted (argmin unchanged).
    d = e2 - 2.0 * xe

    # argmin with first-occurrence tie break (matches torch.argmin)
    iota = lax.broadcasted_iota(jnp.int32, (tm, k_pad), 1)
    dmin = jnp.min(d, axis=1, keepdims=True)
    idx = jnp.min(jnp.where(d <= dmin, iota, k_pad), axis=1,
                  keepdims=True)                                     # [TM, 1]

    # lane-dense i32 index slab (broadcast across 128 lanes -> unmasked vst).
    idx_ref[...] = jnp.broadcast_to(idx, (tm, 128))

    # One-hot stays in VMEM only; quantized = one_hot @ codebook (MXU).
    enc = (iota == idx).astype(jnp.float32)                          # [TM, Kp]
    q = jnp.dot(enc, e, preferred_element_type=jnp.float32)          # [TM, Dp]
    q_ref[...] = q

    diff = q - x

    def write_stats(row_scale):
        if row_scale is None:
            sq = jnp.sum(diff * diff)
            colsum = jnp.sum(enc, axis=0, keepdims=True)             # [1, Kp]
        else:
            sq = jnp.sum(jnp.sum(diff * diff, axis=1, keepdims=True) * row_scale)
            colsum = jnp.sum(enc * row_scale, axis=0, keepdims=True)
        sq_ref[...] = jnp.broadcast_to(jnp.reshape(sq, (1, 1, 1)), (1, 1, 128))
        cnt_ref[...] = jnp.reshape(colsum, (1, 1, k_pad))

    if m_true % block_m == 0:
        # No padded rows anywhere: no masking passes at all.
        write_stats(None)
    else:
        last = pl.num_programs(0) - 1

        @pl.when(i != last)
        def _():
            write_stats(None)

        @pl.when(i == last)
        def _():
            rows = lax.broadcasted_iota(jnp.int32, (tm, 1), 0) + i * block_m
            write_stats((rows < m_true).astype(jnp.float32))


@functools.partial(jax.jit, static_argnames=("num_embeddings", "block_m",
                                             "use_bf16_distances"))
def vector_quantizer_forward(inputs_nchw, embedding, num_embeddings,
                             block_m=512, use_bf16_distances=False):
    """Eval-mode VectorQuantizerEMA forward.

    inputs_nchw : [N, C, H, W] float32  (C == embedding_dim)
    embedding   : [num_embeddings, embedding_dim] float32 codebook
    returns (loss, quantized_nchw, perplexity, encodings)
    """
    n, c, h, w = inputs_nchw.shape
    k = num_embeddings
    m = n * h * w

    # pad to TPU-friendly shapes: lane dims (D, K) to multiples of 128,
    # rows to a multiple of the M tile.
    d_pad = _round_up(c, 128)
    k_pad = _round_up(k, 128)
    tm = _round_up(min(block_m, _round_up(m, 8)), 8)
    if use_bf16_distances:
        tm = _round_up(tm, 16)          # bf16 sublane packing
    m_pad = _round_up(m, tm)
    grid_m = m_pad // tm

    # NCHW -> NHWC -> flat [M, D] -> zero-pad.  jnp.pad lets XLA fuse the
    # transpose / reshape / pad into a single copy.
    flat = jnp.transpose(inputs_nchw, (0, 2, 3, 1)).reshape(m, c)
    flat_p = jnp.pad(flat.astype(jnp.float32),
                     ((0, m_pad - m), (0, d_pad - c)))

    emb = embedding.astype(jnp.float32)
    emb_p = jnp.pad(emb, ((0, k_pad - k), (0, d_pad - c)))

    # codebook squared norms, hoisted out of the kernel; padded codes get a
    # huge norm so the argmin never selects them.
    e2 = jnp.sum(emb * emb, axis=1).reshape(1, k)
    e2_p = jnp.pad(e2, ((0, 0), (0, k_pad - k)), constant_values=1e30)

    kernel = functools.partial(_vq_kernel, m_true=m, block_m=tm,
                               use_bf16_distances=use_bf16_distances)

    out_shapes = (
        jax.ShapeDtypeStruct((m_pad, d_pad), jnp.float32),     # quantized
        jax.ShapeDtypeStruct((m_pad, 128), jnp.int32),         # argmin indices
        jax.ShapeDtypeStruct((grid_m, 1, 128), jnp.float32),   # sq-err partials
        jax.ShapeDtypeStruct((grid_m, 1, k_pad), jnp.float32),  # count partials
    )

    flops = 4 * m_pad * k_pad * d_pad  # two MXU matmuls per row tile
    bytes_accessed = 4 * (2 * m_pad * d_pad + k_pad * d_pad + k_pad
                          + m_pad * 128 + grid_m * (128 + k_pad))

    q_p, idx_p, sq_part, cnt_part = pl.pallas_call(
        kernel,
        out_shape=out_shapes,
        grid_spec=pltpu.PrefetchScalarGridSpec(
            num_scalar_prefetch=0,
            grid=(grid_m,),
            in_specs=[
                pl.BlockSpec((tm, d_pad), lambda i: (i, 0)),       # x tile
                pl.BlockSpec((k_pad, d_pad), lambda i: (0, 0)),    # codebook
                pl.BlockSpec((1, k_pad), lambda i: (0, 0)),        # e2
            ],
            out_specs=(
                pl.BlockSpec((tm, d_pad), lambda i: (i, 0)),       # quantized
                pl.BlockSpec((tm, 128), lambda i: (i, 0)),         # indices
                pl.BlockSpec((1, 1, 128), lambda i: (i, 0, 0)),    # sq partial
                pl.BlockSpec((1, 1, k_pad), lambda i: (i, 0, 0)),  # cnt partial
            ),
        ),
        compiler_params=pltpu.CompilerParams(
            dimension_semantics=("parallel",),
            vmem_limit_bytes=_vmem_limit_bytes(tm, d_pad, k_pad),
        ),
        cost_estimate=pl.CostEstimate(
            flops=flops, transcendentals=0, bytes_accessed=bytes_accessed),
    )(flat_p, emb_p, e2_p)

    # tiny epilogue reductions / one-hot reconstruction in plain JAX
    idx = idx_p[:m, 0]
    encodings = jax.nn.one_hot(idx, k, dtype=jnp.float32)

    sq_total = jnp.sum(sq_part[:, 0, 0])
    loss = jnp.float32(COMMITMENT_COST) * sq_total / jnp.float32(m * c)

    counts = jnp.sum(cnt_part[:, 0, :k], axis=0)
    avg_probs = counts / jnp.float32(m)
    perplexity = jnp.exp(-jnp.sum(avg_probs * jnp.log(avg_probs + 1e-10)))

    # straight-through estimator: forward value is `quantized`
    q_flat = q_p[:m, :c]
    quantized_nchw = jnp.transpose(q_flat.reshape(n, h, w, c), (0, 3, 1, 2))
    return loss, quantized_nchw, perplexity, encodings


def _reference(inputs_nchw, embedding):
    """Pure-JAX reference mirroring the PyTorch forward (eval mode)."""
    n, c, h, w = inputs_nchw.shape
    x = jnp.transpose(inputs_nchw, (0, 2, 3, 1)).reshape(-1, c)
    d = (jnp.sum(x ** 2, axis=1, keepdims=True)
         + jnp.sum(embedding ** 2, axis=1)
         - 2.0 * x @ embedding.T)
    idx = jnp.argmin(d, axis=1)
    enc = jax.nn.one_hot(idx, embedding.shape[0], dtype=jnp.float32)
    q = enc @ embedding
    loss = COMMITMENT_COST * jnp.mean((q - x) ** 2)
    avg = jnp.mean(enc, axis=0)
    perp = jnp.exp(-jnp.sum(avg * jnp.log(avg + 1e-10)))
    q_nchw = jnp.transpose(q.reshape(n, h, w, c), (0, 3, 1, 2))
    return loss, q_nchw, perp, enc


if __name__ == "__main__":
    batch, channels, spatial = 2, 4, 16
    num_embeddings, embedding_dim = 16, channels

    key = jax.random.PRNGKey(0)
    k_in, k_emb, k_in2 = jax.random.split(key, 3)
    x = jax.random.normal(k_in, (batch, channels, spatial, spatial),
                          dtype=jnp.float32)
    embedding = jax.random.normal(k_emb, (num_embeddings, embedding_dim),
                                  dtype=jnp.float32)

    # block_m=128 -> M = 512 rows run as a 4-step "parallel" grid (all full
    # tiles -> no masking path).
    loss, quantized, perplexity, encodings = vector_quantizer_forward(
        x, embedding, num_embeddings, block_m=128)
    jax.block_until_ready((loss, quantized, perplexity, encodings))

    r_loss, r_q, r_perp, r_enc = _reference(x, embedding)
    assert quantized.shape == (batch, channels, spatial, spatial)
    assert encodings.shape == (batch * spatial * spatial, num_embeddings)
    assert jnp.allclose(loss, r_loss, atol=1e-5)
    assert jnp.allclose(quantized, r_q, atol=1e-5)
    assert jnp.allclose(perplexity, r_perp, atol=1e-4)
    assert jnp.allclose(encodings, r_enc)

    # ragged-M path: 2*10*10 = 200 rows -> M_pad = 256, last tile masked via
    # the pl.when-gated statistics path.
    x2_in = jax.random.normal(k_in2, (2, channels, 10, 10), dtype=jnp.float32)
    loss2, q2, perp2, enc2 = vector_quantizer_forward(
        x2_in, embedding, num_embeddings, block_m=128)
    jax.block_until_ready((loss2, q2, perp2, enc2))
    r2_loss, r2_q, r2_perp, r2_enc = _reference(x2_in, embedding)
    assert jnp.allclose(loss2, r2_loss, atol=1e-5)
    assert jnp.allclose(q2, r2_q, atol=1e-5)
    assert jnp.allclose(perp2, r2_perp, atol=1e-4)
    assert jnp.allclose(enc2, r2_enc)

    print("KERNEL_OK")
</pallas_src>

<mosaic_0001>
module attributes {stable_mosaic.version = 11 : i64} {
  func.func @_vq_kernel(%arg0: i32, %arg1: memref<128x128xf32, #tpu.memory_space<vmem>>, %arg2: memref<128x128xf32, #tpu.memory_space<vmem>>, %arg3: memref<1x128xf32, #tpu.memory_space<vmem>>, %arg4: memref<128x128xf32, #tpu.memory_space<vmem>>, %arg5: memref<128x128xi32, #tpu.memory_space<vmem>>, %arg6: memref<1x1x128xf32, #tpu.memory_space<vmem>>, %arg7: memref<1x1x128xf32, #tpu.memory_space<vmem>>) attributes {dimension_semantics = [#tpu.dimension_semantics<parallel>], iteration_bounds = array<i64: 4>, scalar_prefetch = 0 : i64, scratch_operands = 0 : i64, tpu.core_type = #tpu.core_type<tc>, window_params = [{transform_indices = @transform_0, window_bounds = array<i64: 128, 128>}, {pipeline_mode = #tpu.pipeline_mode<synchronous>, transform_indices = @transform_1, window_bounds = array<i64: 128, 128>}, {pipeline_mode = #tpu.pipeline_mode<synchronous>, transform_indices = @transform_2, window_bounds = array<i64: 1, 128>}, {transform_indices = @transform_3, window_bounds = array<i64: 128, 128>}, {transform_indices = @transform_4, window_bounds = array<i64: 128, 128>}, {transform_indices = @transform_5, window_bounds = array<i64: 1, 1, 128>}, {transform_indices = @transform_6, window_bounds = array<i64: 1, 1, 128>}]} {
    %c0 = arith.constant 0 : index
    %c0_0 = arith.constant 0 : index
    %0 = vector.load %arg1[%c0, %c0_0] : memref<128x128xf32, #tpu.memory_space<vmem>>, vector<128x128xf32>
    %c0_1 = arith.constant 0 : index
    %c0_2 = arith.constant 0 : index
    %1 = vector.load %arg2[%c0_1, %c0_2] : memref<128x128xf32, #tpu.memory_space<vmem>>, vector<128x128xf32>
    %c0_3 = arith.constant 0 : index
    %c0_4 = arith.constant 0 : index
    %2 = vector.load %arg3[%c0_3, %c0_4] : memref<1x128xf32, #tpu.memory_space<vmem>>, vector<1x128xf32>
    %cst = arith.constant dense<0.000000e+00> : vector<128x128xf32>
    %3 = tpu.matmul %0, %1, %cst {dimension_numbers = #tpu.dot_dimension_numbers<[1], [1], [0], [0], [0, 0, 1, 0], [], []>} : vector<128x128xf32>, vector<128x128xf32>, vector<128x128xf32> -> vector<128x128xf32>
    %cst_5 = arith.constant 2.000000e+00 : f32
    %4 = vector.broadcast %cst_5 : f32 to vector<128x128xf32>
    %5 = arith.mulf %4, %3 : vector<128x128xf32>
    %6 = vector.broadcast %2 : vector<1x128xf32> to vector<128x128xf32>
    %7 = arith.subf %6, %5 : vector<128x128xf32>
    %8 = tpu.iota {dimensions = array<i32: 1>} : vector<128x128xi32>
    %cst_6 = arith.constant dense<0x7F800000> : vector<128xf32>
    %9 = vector.multi_reduction <minimumf>, %7, %cst_6 [1] : vector<128x128xf32> to vector<128xf32>
    %10 = vector.shape_cast %9 : vector<128xf32> to vector<128x1xf32>
    %11 = vector.broadcast %10 : vector<128x1xf32> to vector<128x128xf32>
    %12 = arith.cmpf ole, %7, %11 : vector<128x128xf32>
    %c128_i32 = arith.constant 128 : i32
    %13 = vector.broadcast %c128_i32 : i32 to vector<128x128xi32>
    %14 = arith.select %12, %8, %13 : vector<128x128xi1>, vector<128x128xi32>
    %cst_7 = arith.constant dense<2147483647> : vector<128xi32>
    %15 = vector.multi_reduction <minsi>, %14, %cst_7 [1] : vector<128x128xi32> to vector<128xi32>
    %16 = vector.shape_cast %15 : vector<128xi32> to vector<128x1xi32>
    %17 = vector.shape_cast %16 : vector<128x1xi32> to vector<128x1xi32>
    %18 = vector.broadcast %17 : vector<128x1xi32> to vector<128x128xi32>
    %c0_8 = arith.constant 0 : index
    %c0_9 = arith.constant 0 : index
    %19 = vector.load %arg5[%c0_8, %c0_9] : memref<128x128xi32, #tpu.memory_space<vmem>>, vector<128x128xi32>
    tpu.vector_store %arg5[%c0_8, %c0_9], %18 {strides = array<i32>} : memref<128x128xi32, #tpu.memory_space<vmem>>, vector<128x128xi32>,
    %20 = vector.broadcast %16 : vector<128x1xi32> to vector<128x128xi32>
    %21 = arith.cmpi eq, %8, %20 : vector<128x128xi32>
    %22 = arith.extui %21 : vector<128x128xi1> to vector<128x128xi32>
    %23 = arith.sitofp %22 : vector<128x128xi32> to vector<128x128xf32>
    %cst_10 = arith.constant dense<0.000000e+00> : vector<128x128xf32>
    %24 = tpu.matmul %23, %1, %cst_10 {dimension_numbers = #tpu.dot_dimension_numbers<[1], [0], [0], [1], [0, 0, 1, 1], [], []>} : vector<128x128xf32>, vector<128x128xf32>, vector<128x128xf32> -> vector<128x128xf32>
    %c0_11 = arith.constant 0 : index
    %c0_12 = arith.constant 0 : index
    %25 = vector.load %arg4[%c0_11, %c0_12] : memref<128x128xf32, #tpu.memory_space<vmem>>, vector<128x128xf32>
    tpu.vector_store %arg4[%c0_11, %c0_12], %24 {strides = array<i32>} : memref<128x128xf32, #tpu.memory_space<vmem>>, vector<128x128xf32>,
    %26 = arith.subf %24, %0 : vector<128x128xf32>
    %27 = arith.mulf %26, %26 : vector<128x128xf32>
    %28 = vector.shape_cast %27 : vector<128x128xf32> to vector<1x128x128xf32>
    %cst_13 = arith.constant dense<0.000000e+00> : vector<1xf32>
    %29 = vector.multi_reduction <add>, %28, %cst_13 [1, 2] : vector<1x128x128xf32> to vector<1xf32>
    %30 = vector.shape_cast %29 : vector<1xf32> to vector<1x1x1xf32>
    %31 = vector.extract %30[0, 0, 0] : f32 from vector<1x1x1xf32>
    %cst_14 = arith.constant dense<0.000000e+00> : vector<128xf32>
    %32 = vector.multi_reduction <add>, %23, %cst_14 [0] : vector<128x128xf32> to vector<128xf32>
    %33 = vector.shape_cast %32 : vector<128xf32> to vector<1x128xf32>
    %34 = vector.broadcast %31 : f32 to vector<1x1x1xf32>
    %35 = vector.shape_cast %34 : vector<1x1x1xf32> to vector<1x1x1xf32>
    %36 = vector.broadcast %35 : vector<1x1x1xf32> to vector<1x1x128xf32>
    %c0_15 = arith.constant 0 : index
    %c0_16 = arith.constant 0 : index
    %c0_17 = arith.constant 0 : index
    %37 = vector.load %arg6[%c0_15, %c0_16, %c0_17] : memref<1x1x128xf32, #tpu.memory_space<vmem>>, vector<1x1x128xf32>
    tpu.vector_store %arg6[%c0_15, %c0_16, %c0_17], %36 {strides = array<i32>} : memref<1x1x128xf32, #tpu.memory_space<vmem>>, vector<1x1x128xf32>,
    %38 = vector.shape_cast %33 : vector<1x128xf32> to vector<1x1x128xf32>
    %c0_18 = arith.constant 0 : index
    %c0_19 = arith.constant 0 : index
    %c0_20 = arith.constant 0 : index
    %39 = vector.load %arg7[%c0_18, %c0_19, %c0_20] : memref<1x1x128xf32, #tpu.memory_space<vmem>>, vector<1x1x128xf32>
    tpu.vector_store %arg7[%c0_18, %c0_19, %c0_20], %38 {strides = array<i32>} : memref<1x1x128xf32, #tpu.memory_space<vmem>>, vector<1x1x128xf32>,
    return
  }
  func.func @transform_0(%arg0: i32) -> (i32, i32) {
    %c0_i32 = arith.constant 0 : i32
    %c0_i32_0 = arith.constant 0 : i32
    return %arg0, %c0_i32 : i32, i32
  }
  func.func @transform_1(%arg0: i32) -> (i32, i32) {
    %c0_i32 = arith.constant 0 : i32
    %c0_i32_0 = arith.constant 0 : i32
    %c0_i32_1 = arith.constant 0 : i32
    return %c0_i32, %c0_i32_0 : i32, i32
  }
  func.func @transform_2(%arg0: i32) -> (i32, i32) {
    %c0_i32 = arith.constant 0 : i32
    %c0_i32_0 = arith.constant 0 : i32
    %c0_i32_1 = arith.constant 0 : i32
    return %c0_i32, %c0_i32_0 : i32, i32
  }
  func.func @transform_3(%arg0: i32) -> (i32, i32) {
    %c0_i32 = arith.constant 0 : i32
    %c0_i32_0 = arith.constant 0 : i32
    return %arg0, %c0_i32 : i32, i32
  }
  func.func @transform_4(%arg0: i32) -> (i32, i32) {
    %c0_i32 = arith.constant 0 : i32
    %c0_i32_0 = arith.constant 0 : i32
    return %arg0, %c0_i32 : i32, i32
  }
  func.func @transform_5(%arg0: i32) -> (i32, i32, i32) {
    %c0_i32 = arith.constant 0 : i32
    %c0_i32_0 = arith.constant 0 : i32
    %c0_i32_1 = arith.constant 0 : i32
    return %arg0, %c0_i32, %c0_i32_0 : i32, i32, i32
  }
  func.func @transform_6(%arg0: i32) -> (i32, i32, i32) {
    %c0_i32 = arith.constant 0 : i32
    %c0_i32_0 = arith.constant 0 : i32
    %c0_i32_1 = arith.constant 0 : i32
    return %arg0, %c0_i32, %c0_i32_0 : i32, i32, i32
  }
}

</mosaic_0001>

<llo_original>
// kernel: vector_quantizer_forward.1
$region0: #{vector_quantizer_forward.1}
  #allocation0 [shape = 'u32[]', space=smem, size = 0x4, offset = 0x4, fixed_abs, tag = 'smem constant byte address 0x4 - core index']
  #allocation1 [shape = 'u32[72,128]{1,0:T(1,128)}', space=vmem, size = 0x9000, scoped, tag = 'internal scratch']
  %s0 = inlined_call_operand.vmem [shape: f32[512,128], index: 0, kind: input, shape index: {}]
  %s1 = inlined_call_operand.vmem [shape: f32[128,128], index: 1, kind: input, shape index: {}]
  %s2 = inlined_call_operand.vmem [shape: f32[1,128], index: 2, kind: input, shape index: {}]
  %s3 = inlined_call_operand.vmem [shape: f32[512,128], index: 3, kind: output, shape index: {0}]
  %s4 = inlined_call_operand.vmem [shape: s32[512,128], index: 4, kind: output, shape index: {1}]
  %s5 = inlined_call_operand.vmem [shape: f32[4,1,128], index: 5, kind: output, shape index: {2}]
  %s6 = inlined_call_operand.vmem [shape: f32[4,1,128], index: 6, kind: output, shape index: {3}]
  %7 = xla_tuple %s3, %s4, %s5, %s6
  %s8 = sld [smem:[#allocation0]]
  $region69: #{vector_quantizer_forward.1} parent=0
    _
  %s10 = ssub.s32 1, %s8
  %s11 = scalar_select 0, %s10, %s8
  loop: start=0, step=1, limit=6
  $region2: #{vector_quantizer_forward.1} parent=0 // loop_pre_header
    _
  $region3: #{vector_quantizer_forward.1} parent=0 // loop_header
    %s13 = sphi 0, %s17
    %p14 = scmp.ge.s32.totalorder %s13, 6
    %s23 = sphi 0, %s25
    %s26 = sphi 0, %s23
    %s27 = sphi 0, %s26
    %s43 = sphi 0, %s27
    %s47 = sphi 0, %s47
    %s49 = sphi 0, %s47
    %s50 = sphi 0, %s49
    %s64 = sphi 0, %s50
    %s68 = sphi 0, %s68
    %s70 = sphi 0, %s68
    %s71 = sphi 0, %s70
    %s85 = sphi 0, %s71
    %s91 = sphi 0, %s93
    %s94 = sphi 0, %s91
    %s95 = sphi 0, %s94
    %s111 = sphi 0, %s95
    %s117 = sphi 0, %s119
    %s120 = sphi 0, %s117
    %s121 = sphi 0, %s120
    %s137 = sphi 0, %s121
    %s143 = sphi 0, %s145
    %s146 = sphi 0, %s143
    %s147 = sphi 0, %s146
    %s163 = sphi 0, %s147
    %s169 = sphi 0, %s171
    %s172 = sphi 0, %s169
    %s173 = sphi 0, %s172
    %s189 = sphi 0, %s173
  $region4: #{vector_quantizer_forward.1} parent=0 // loop_header_branch
    %16 = sbr.rel (%p14) target = $region8
  $region5: #{vector_quantizer_forward.1} parent=0 // loop_body
    %s18 = ssub.s32 %s13, 1
    %s19 = ssub.s32 %s13, 2
    %s20 = sadd.s32 %s13, 1
    %s21 = ssub.s32 %s13, %s20
    %p22 = scmp.eq.s32.totalorder %s21, 0
    %s24 = sadd.s32 %s23, 1
    %s25 = scalar_select %p22, %s23, %s24
    %p28 = pneg %p22
    %p29 = scmp.eq.s32.totalorder %s13, 3
    %p30 = por %p28, %p29
    %p31 = scmp.ne.s32.totalorder %s23, %s26
    %p32 = scmp.eq.s32.totalorder %s13, 0
    %p33 = por %p31, %p32
    %p34 = scmp.ne.s32.totalorder %s23, %s26
    %p35 = scmp.eq.s32.totalorder %s18, 3
    %p36 = por %p34, %p35
    %p37 = scmp.ne.s32.totalorder %s26, %s27
    %p38 = scmp.eq.s32.totalorder %s18, 0
    %p39 = por %p37, %p38
    %p40 = scmp.ne.s32.totalorder %s26, %s27
    %p41 = scmp.eq.s32.totalorder %s19, 3
    %p42 = por %p40, %p41
    %p44 = scmp.ne.s32.totalorder %s27, %s43
    %p45 = scmp.eq.s32.totalorder %s19, 0
    %p46 = por %p44, %p45
    %s48 = sadd.s32 %s47, 1
    %p51 = scmp.eq.s32.totalorder %s13, 3
    %p52 = scmp.ne.s32.totalorder %s47, %s49
    %p53 = scmp.eq.s32.totalorder %s13, 0
    %p54 = por %p52, %p53
    %p55 = scmp.ne.s32.totalorder %s47, %s49
    %p56 = scmp.eq.s32.totalorder %s18, 3
    %p57 = por %p55, %p56
    %p58 = scmp.ne.s32.totalorder %s49, %s50
    %p59 = scmp.eq.s32.totalorder %s18, 0
    %p60 = por %p58, %p59
    %p61 = scmp.ne.s32.totalorder %s49, %s50
    %p62 = scmp.eq.s32.totalorder %s19, 3
    %p63 = por %p61, %p62
    %p65 = scmp.ne.s32.totalorder %s50, %s64
    %p66 = scmp.eq.s32.totalorder %s19, 0
    %p67 = por %p65, %p66
    %s69 = sadd.s32 %s68, 1
    %p72 = scmp.eq.s32.totalorder %s13, 3
    %p73 = scmp.ne.s32.totalorder %s68, %s70
    %p74 = scmp.eq.s32.totalorder %s13, 0
    %p75 = por %p73, %p74
    %p76 = scmp.ne.s32.totalorder %s68, %s70
    %p77 = scmp.eq.s32.totalorder %s18, 3
    %p78 = por %p76, %p77
    %p79 = scmp.ne.s32.totalorder %s70, %s71
    %p80 = scmp.eq.s32.totalorder %s18, 0
    %p81 = por %p79, %p80
    %p82 = scmp.ne.s32.totalorder %s70, %s71
    %p83 = scmp.eq.s32.totalorder %s19, 3
    %p84 = por %p82, %p83
    %p86 = scmp.ne.s32.totalorder %s71, %s85
    %p87 = scmp.eq.s32.totalorder %s19, 0
    %p88 = por %p86, %p87
    %s89 = ssub.s32 %s13, %s20
    %p90 = scmp.eq.s32.totalorder %s89, 0
    %s92 = sadd.s32 %s91, 1
    %s93 = scalar_select %p90, %s91, %s92
    %p96 = pneg %p90
    %p97 = scmp.eq.s32.totalorder %s13, 3
    %p98 = por %p96, %p97
    %p99 = scmp.ne.s32.totalorder %s91, %s94
    %p100 = scmp.eq.s32.totalorder %s13, 0
    %p101 = por %p99, %p100
    %p102 = scmp.ne.s32.totalorder %s91, %s94
    %p103 = scmp.eq.s32.totalorder %s18, 3
    %p104 = por %p102, %p103
    %p105 = scmp.ne.s32.totalorder %s94, %s95
    %p106 = scmp.eq.s32.totalorder %s18, 0
    %p107 = por %p105, %p106
    %p108 = scmp.ne.s32.totalorder %s94, %s95
    %p109 = scmp.eq.s32.totalorder %s19, 3
    %p110 = por %p108, %p109
    %p112 = scmp.ne.s32.totalorder %s95, %s111
    %p113 = scmp.eq.s32.totalorder %s19, 0
    %p114 = por %p112, %p113
    %s115 = ssub.s32 %s13, %s20
    %p116 = scmp.eq.s32.totalorder %s115, 0
    %s118 = sadd.s32 %s117, 1
    %s119 = scalar_select %p116, %s117, %s118
    %p122 = pneg %p116
    %p123 = scmp.eq.s32.totalorder %s13, 3
    %p124 = por %p122, %p123
    %p125 = scmp.ne.s32.totalorder %s117, %s120
    %p126 = scmp.eq.s32.totalorder %s13, 0
    %p127 = por %p125, %p126
    %p128 = scmp.ne.s32.totalorder %s117, %s120
    %p129 = scmp.eq.s32.totalorder %s18, 3
    %p130 = por %p128, %p129
    %p131 = scmp.ne.s32.totalorder %s120, %s121
    %p132 = scmp.eq.s32.totalorder %s18, 0
    %p133 = por %p131, %p132
    %p134 = scmp.ne.s32.totalorder %s120, %s121
    %p135 = scmp.eq.s32.totalorder %s19, 3
    %p136 = por %p134, %p135
    %p138 = scmp.ne.s32.totalorder %s121, %s137
    %p139 = scmp.eq.s32.totalorder %s19, 0
    %p140 = por %p138, %p139
    %s141 = ssub.s32 %s13, %s20
    %p142 = scmp.eq.s32.totalorder %s141, 0
    %s144 = sadd.s32 %s143, 1
    %s145 = scalar_select %p142, %s143, %s144
    %p148 = pneg %p142
    %p149 = scmp.eq.s32.totalorder %s13, 3
    %p150 = por %p148, %p149
    %p151 = scmp.ne.s32.totalorder %s143, %s146
    %p152 = scmp.eq.s32.totalorder %s13, 0
    %p153 = por %p151, %p152
    %p154 = scmp.ne.s32.totalorder %s143, %s146
    %p155 = scmp.eq.s32.totalorder %s18, 3
    %p156 = por %p154, %p155
    %p157 = scmp.ne.s32.totalorder %s146, %s147
    %p158 = scmp.eq.s32.totalorder %s18, 0
    %p159 = por %p157, %p158
    %p160 = scmp.ne.s32.totalorder %s146, %s147
    %p161 = scmp.eq.s32.totalorder %s19, 3
    %p162 = por %p160, %p161
    %p164 = scmp.ne.s32.totalorder %s147, %s163
    %p165 = scmp.eq.s32.totalorder %s19, 0
    %p166 = por %p164, %p165
    %s167 = ssub.s32 %s13, %s20
    %p168 = scmp.eq.s32.totalorder %s167, 0
    %s170 = sadd.s32 %s169, 1
    %s171 = scalar_select %p168, %s169, %s170
    %p174 = pneg %p168
    %p175 = scmp.eq.s32.totalorder %s13, 3
    %p176 = por %p174, %p175
    %p177 = scmp.ne.s32.totalorder %s169, %s172
    %p178 = scmp.eq.s32.totalorder %s13, 0
    %p179 = por %p177, %p178
    %p180 = scmp.ne.s32.totalorder %s169, %s172
    %p181 = scmp.eq.s32.totalorder %s18, 3
    %p182 = por %p180, %p181
    %p183 = scmp.ne.s32.totalorder %s172, %s173
    %p184 = scmp.eq.s32.totalorder %s18, 0
    %p185 = por %p183, %p184
    %p186 = scmp.ne.s32.totalorder %s172, %s173
    %p187 = scmp.eq.s32.totalorder %s19, 3
    %p188 = por %p186, %p187
    %p190 = scmp.ne.s32.totalorder %s173, %s189
    %p191 = scmp.eq.s32.totalorder %s19, 0
    %p192 = por %p190, %p191
    %p193 = scmp.le.s32.totalorder 1, %s13
    %p194 = scmp.lt.s32.totalorder %s13, 5
    %p195 = pnand %p193, %p194
    %p196 = pneg %p195
    // Predicated region
    $region9: #{vector_quantizer_forward.1} parent=5 // pred_check
      _
    $region10: #{vector_quantizer_forward.1} parent=5 // pred_check_branch
      %198 = sbr.rel (%p195) target = $region12
    $region11: #{vector_quantizer_forward.1} parent=5 // pred_region
      %s199 = ssub.s32 %s13, 1
      // Predicated region
      $region13: #{vector_quantizer_forward.1} parent=11 // pred_check
        %p200 = pneg %p60
      $region14: #{vector_quantizer_forward.1} parent=11 // pred_check_branch
        %202 = sbr.rel (%p200) target = $region16
      $region15: #{vector_quantizer_forward.1} parent=11 // pred_region
        _
      $region16: #{vector_quantizer_forward.1} parent=11 // pred_fallthru
        _
      // Predicated region
      $region17: #{vector_quantizer_forward.1} parent=11 // pred_check
        %p203 = pneg %p81
      $region18: #{vector_quantizer_forward.1} parent=11 // pred_check_branch
        %205 = sbr.rel (%p203) target = $region20
      $region19: #{vector_quantizer_forward.1} parent=11 // pred_region
        _
      $region20: #{vector_quantizer_forward.1} parent=11 // pred_fallthru
        _
    $region12: #{vector_quantizer_forward.1} parent=5 // pred_fallthru
      _
    %p206 = scmp.lt.s32.totalorder %s13, 4
    // Predicated region
    $region21: #{vector_quantizer_forward.1} parent=5 // pred_check
      %p207 = pneg %p206
    $region22: #{vector_quantizer_forward.1} parent=5 // pred_check_branch
      %209 = sbr.rel (%p207) target = $region24
    $region23: #{vector_quantizer_forward.1} parent=5 // pred_region
      // Predicated region
      $region25: #{vector_quantizer_forward.1} parent=23 // pred_check
        %p210 = pneg %p33
      $region26: #{vector_quantizer_forward.1} parent=23 // pred_check_branch
        %212 = sbr.rel (%p210) target = $region28
      $region27: #{vector_quantizer_forward.1} parent=23 // pred_region
        %s213 = smul.u32 16, %s13
        %p214 = scmp.lt.s32.totalorder %s213, 63
        %s215 = scalar_select %p214, %s213, 63
        %s216 = smul.addr %s215, 8
        %s217 = scalar_lea.vmem %s0, %s216
        %s218 = smul.u32 16, %s13
      $region28: #{vector_quantizer_forward.1} parent=23 // pred_fallthru
        _
    $region24: #{vector_quantizer_forward.1} parent=5 // pred_fallthru
      _
    %p219 = scmp.le.s32.totalorder 1, %s13
    %p220 = scmp.lt.s32.totalorder %s13, 5
    %p221 = pnand %p219, %p220
    %p222 = pneg %p221
    // Predicated region
    $region29: #{vector_quantizer_forward.1} parent=5 // pred_check
      _
    $region30: #{vector_quantizer_forward.1} parent=5 // pred_check_branch
      %224 = sbr.rel (%p221) target = $region32
    $region31: #{vector_quantizer_forward.1} parent=5 // pred_region
      %s225 = ssub.s32 %s13, 1
      %s226 = smul.u32 16, %s18
      %p227 = scmp.lt.s32.totalorder %s226, 63
      %s228 = scalar_select %p227, %s226, 63
      %s229 = smul.addr %s228, 8
      %s230 = scalar_lea.vmem %s0, %s229
      %p231 = pneg %p39
      %p232 = pneg %p36
      %p233 = pneg %p60
      %p234 = pneg %p57
      %p235 = pneg %p81
      %p236 = pneg %p78
      %p237 = pneg %p107
      %p238 = pneg %p104
      %s239 = smul.u32 16, %s18
      %p240 = scmp.lt.s32.totalorder %s239, 63
      %s241 = scalar_select %p240, %s239, 63
      %s242 = smul.addr %s241, 8
      %s243 = scalar_lea.vmem %s3, %s242
      %p244 = pneg %p133
      %p245 = pneg %p130
      %s246 = smul.u32 16, %s18
      %p247 = scmp.lt.s32.totalorder %s246, 63
      %s248 = scalar_select %p247, %s246, 63
      %s249 = smul.addr %s248, 8
      %s250 = scalar_lea.vmem %s4, %s249
      %p251 = pneg %p159
      %p252 = pneg %p156
      %p253 = scmp.lt.s32.totalorder %s18, 3
      %s254 = scalar_select %p253, %s18, 3
      %s255 = scalar_lea.vmem %s5, %s254
      %p256 = pneg %p185
      %p257 = pneg %p182
      %p258 = scmp.lt.s32.totalorder %s18, 3
      %s259 = scalar_select %p258, %s18, 3
      %s260 = scalar_lea.vmem %s6, %s259
      %s261 = smul.u32 16, %s18
      %p262 = scmp.lt.s32.totalorder %s261, 63
      %s263 = scalar_select %p262, %s261, 63
      %s264 = smul.addr %s263, 8
      %s265 = scalar_lea.vmem %s0, %s264
      %s266 = smul.u32 16, %s18
      %s267 = smul.u32 16, %s18
      %p268 = scmp.lt.s32.totalorder %s267, 63
      %s269 = scalar_select %p268, %s267, 63
      %s270 = smul.addr %s269, 8
      %s271 = scalar_lea.vmem %s3, %s270
      %s272 = smul.u32 16, %s18
      %s273 = smul.u32 16, %s18
      %p274 = scmp.lt.s32.totalorder %s273, 63
      %s275 = scalar_select %p274, %s273, 63
      %s276 = smul.addr %s275, 8
      %s277 = scalar_lea.vmem %s4, %s276
      %s278 = smul.u32 16, %s18
      %p279 = scmp.lt.s32.totalorder %s18, 3
      %s280 = scalar_select %p279, %s18, 3
      %s281 = scalar_lea.vmem %s5, %s280
      %p282 = scmp.lt.s32.totalorder %s18, 3
      %s283 = scalar_select %p282, %s18, 3
      %s284 = scalar_lea.vmem %s6, %s283
      %v285 = vld [vmem:[%s265] sm:$0xff]
      %v286 = vld [vmem:[%s265 + $0x8] sm:$0xff]
      %v287 = vld [vmem:[%s265 + $0x10] sm:$0xff]
      %v288 = vld [vmem:[%s265 + $0x18] sm:$0xff]
      %v289 = vld [vmem:[%s265 + $0x20] sm:$0xff]
      %v290 = vld [vmem:[%s265 + $0x28] sm:$0xff]
      %v291 = vld [vmem:[%s265 + $0x30] sm:$0xff]
      %v292 = vld [vmem:[%s265 + $0x38] sm:$0xff]
      %v293 = vld [vmem:[%s265 + $0x40] sm:$0xff]
      %v294 = vld [vmem:[%s265 + $0x48] sm:$0xff]
      %v295 = vld [vmem:[%s265 + $0x50] sm:$0xff]
      %v296 = vld [vmem:[%s265 + $0x58] sm:$0xff]
      %v297 = vld [vmem:[%s265 + $0x60] sm:$0xff]
      %v298 = vld [vmem:[%s265 + $0x68] sm:$0xff]
      %v299 = vld [vmem:[%s265 + $0x70] sm:$0xff]
      %v300 = vld [vmem:[%s265 + $0x78] sm:$0xff]
      %v301 = vld [vmem:[%s1] sm:$0xff]
      %v302 = vld [vmem:[%s1 + $0x8] sm:$0xff]
      %v303 = vld [vmem:[%s1 + $0x10] sm:$0xff]
      %v304 = vld [vmem:[%s1 + $0x18] sm:$0xff]
      %v305 = vld [vmem:[%s1 + $0x20] sm:$0xff]
      %v306 = vld [vmem:[%s1 + $0x28] sm:$0xff]
      %v307 = vld [vmem:[%s1 + $0x30] sm:$0xff]
      %v308 = vld [vmem:[%s1 + $0x38] sm:$0xff]
      %v309 = vld [vmem:[%s1 + $0x40] sm:$0xff]
      %v310 = vld [vmem:[%s1 + $0x48] sm:$0xff]
      %v311 = vld [vmem:[%s1 + $0x50] sm:$0xff]
      %v312 = vld [vmem:[%s1 + $0x58] sm:$0xff]
      %v313 = vld [vmem:[%s1 + $0x60] sm:$0xff]
      %v314 = vld [vmem:[%s1 + $0x68] sm:$0xff]
      %v315 = vld [vmem:[%s1 + $0x70] sm:$0xff]
      %v316 = vld [vmem:[%s1 + $0x78] sm:$0xff]
      %v317 = vld [vmem:[%s2] sm:$0x1]
      %318 = vmatpush.xpose.msra.mxu0 %v316
      %319 = vmatpush.xpose.msra.mxu0 %v315
      %320 = vmatpush.xpose.msra.mxu0 %v314
      %321 = vmatpush.xpose.msra.mxu0 %v313
      %322 = vmatpush.xpose.msra.mxu0 %v312
      %323 = vmatpush.xpose.msra.mxu0 %v311
      %324 = vmatpush.xpose.msra.mxu0 %v310
      %325 = vmatpush.xpose.msra.mxu0 %v309
      %326 = vmatpush.xpose.msra.mxu0 %v308
      %327 = vmatpush.xpose.msra.mxu0 %v307
      %328 = vmatpush.xpose.msra.mxu0 %v306
      %329 = vmatpush.xpose.msra.mxu0 %v305
      %330 = vmatpush.xpose.msra.mxu0 %v304
      %331 = vmatpush.xpose.msra.mxu0 %v303
      %332 = vmatpush.xpose.msra.mxu0 %v302
      %333 = vmatpush.xpose.msra.mxu0 %v301
      %334 = vmatmul.f32.gmra.mxu0 %v285
      %v335 = vpop.f32.mrf.mxu0
      %v336 = vadd.f32 0.0, %v335
      %337 = vmatmul.f32.gmra.mxu0 %v286
      %v338 = vpop.f32.mrf.mxu0
      %v339 = vadd.f32 0.0, %v338
      %340 = vmatmul.f32.gmra.mxu0 %v287
      %v341 = vpop.f32.mrf.mxu0
      %v342 = vadd.f32 0.0, %v341
      %343 = vmatmul.f32.gmra.mxu0 %v288
      %v344 = vpop.f32.mrf.mxu0
      %v345 = vadd.f32 0.0, %v344
      %346 = vmatmul.f32.gmra.mxu0 %v289
      %v347 = vpop.f32.mrf.mxu0
      %v348 = vadd.f32 0.0, %v347
      %349 = vmatmul.f32.gmra.mxu0 %v290
      %v350 = vpop.f32.mrf.mxu0
      %v351 = vadd.f32 0.0, %v350
      %352 = vmatmul.f32.gmra.mxu0 %v291
      %v353 = vpop.f32.mrf.mxu0
      %v354 = vadd.f32 0.0, %v353
      %355 = vmatmul.f32.gmra.mxu0 %v292
      %v356 = vpop.f32.mrf.mxu0
      %v357 = vadd.f32 0.0, %v356
      %358 = vmatmul.f32.gmra.mxu0 %v293
      %v359 = vpop.f32.mrf.mxu0
      %v360 = vadd.f32 0.0, %v359
      %361 = vmatmul.f32.gmra.mxu0 %v294
      %v362 = vpop.f32.mrf.mxu0
      %v363 = vadd.f32 0.0, %v362
      %364 = vmatmul.f32.gmra.mxu0 %v295
      %v365 = vpop.f32.mrf.mxu0
      %v366 = vadd.f32 0.0, %v365
      %367 = vmatmul.f32.gmra.mxu0 %v296
      %v368 = vpop.f32.mrf.mxu0
      %v369 = vadd.f32 0.0, %v368
      %370 = vmatmul.f32.gmra.mxu0 %v297
      %v371 = vpop.f32.mrf.mxu0
      %v372 = vadd.f32 0.0, %v371
      %373 = vmatmul.f32.gmra.mxu0 %v298
      %v374 = vpop.f32.mrf.mxu0
      %v375 = vadd.f32 0.0, %v374
      %376 = vmatmul.f32.gmra.mxu0 %v299
      %v377 = vpop.f32.mrf.mxu0
      %v378 = vadd.f32 0.0, %v377
      %379 = vmatmul.f32.gmra.mxu0 %v300
      %v380 = vpop.f32.mrf.mxu0
      %v381 = vadd.f32 0.0, %v380
      %382 = vdwg.mxu0
      %v383 = vmul.f32 %v336, 2.0
      %v384 = vmul.f32 %v339, 2.0
      %v385 = vmul.f32 %v342, 2.0
      %v386 = vmul.f32 %v345, 2.0
      %v387 = vmul.f32 %v348, 2.0
      %v388 = vmul.f32 %v351, 2.0
      %v389 = vmul.f32 %v354, 2.0
      %v390 = vmul.f32 %v357, 2.0
      %v391 = vmul.f32 %v360, 2.0
      %v392 = vmul.f32 %v363, 2.0
      %v393 = vmul.f32 %v366, 2.0
      %v394 = vmul.f32 %v369, 2.0
      %v395 = vmul.f32 %v372, 2.0
      %v396 = vmul.f32 %v375, 2.0
      %v397 = vmul.f32 %v378, 2.0
      %v398 = vmul.f32 %v381, 2.0
      %v400 = vperm.slane %v317, 0
      %v402 = vsub.f32 %v400, %v383
      %v403 = vsub.f32 %v400, %v384
      %v404 = vsub.f32 %v400, %v385
      %v405 = vsub.f32 %v400, %v386
      %v406 = vsub.f32 %v400, %v387
      %v407 = vsub.f32 %v400, %v388
      %v408 = vsub.f32 %v400, %v389
      %v409 = vsub.f32 %v400, %v390
      %v410 = vsub.f32 %v400, %v391
      %v411 = vsub.f32 %v400, %v392
      %v412 = vsub.f32 %v400, %v393
      %v413 = vsub.f32 %v400, %v394
      %v414 = vsub.f32 %v400, %v395
      %v415 = vsub.f32 %v400, %v396
      %v416 = vsub.f32 %v400, %v397
      %v417 = vsub.f32 %v400, %v398
      %v418 = vlaneseq
      %v419 = vand.u32 %v418, 127
      %420 = vmin.xlane.f32.xlu0 %v402
      %v421 = vpop.xlane.xlu0 %420
      %422 = vmin.xlane.f32.xlu0 %v403
      %v423 = vpop.xlane.xlu0 %422
      %424 = vmin.xlane.f32.xlu0 %v404
      %v425 = vpop.xlane.xlu0 %424
      %426 = vmin.xlane.f32.xlu0 %v405
      %v427 = vpop.xlane.xlu0 %426
      %428 = vmin.xlane.f32.xlu0 %v406
      %v429 = vpop.xlane.xlu0 %428
      %430 = vmin.xlane.f32.xlu0 %v407
      %v431 = vpop.xlane.xlu0 %430
      %432 = vmin.xlane.f32.xlu0 %v408
      %v433 = vpop.xlane.xlu0 %432
      %434 = vmin.xlane.f32.xlu0 %v409
      %v435 = vpop.xlane.xlu0 %434
      %436 = vmin.xlane.f32.xlu0 %v410
      %v437 = vpop.xlane.xlu0 %436
      %438 = vmin.xlane.f32.xlu0 %v411
      %v439 = vpop.xlane.xlu0 %438
      %440 = vmin.xlane.f32.xlu0 %v412
      %v441 = vpop.xlane.xlu0 %440
      %442 = vmin.xlane.f32.xlu0 %v413
      %v443 = vpop.xlane.xlu0 %442
      %444 = vmin.xlane.f32.xlu0 %v414
      %v445 = vpop.xlane.xlu0 %444
      %446 = vmin.xlane.f32.xlu0 %v415
      %v447 = vpop.xlane.xlu0 %446
      %448 = vmin.xlane.f32.xlu0 %v416
      %v449 = vpop.xlane.xlu0 %448
      %450 = vmin.xlane.f32.xlu0 %v417
      %v451 = vpop.xlane.xlu0 %450
      %vm452 = vcmp.le.f32.partialorder %v402, %v421
      %vm453 = vcmp.le.f32.partialorder %v403, %v423
      %vm454 = vcmp.le.f32.partialorder %v404, %v425
      %vm455 = vcmp.le.f32.partialorder %v405, %v427
      %vm456 = vcmp.le.f32.partialorder %v406, %v429
      %vm457 = vcmp.le.f32.partialorder %v407, %v431
      %vm458 = vcmp.le.f32.partialorder %v408, %v433
      %vm459 = vcmp.le.f32.partialorder %v409, %v435
      %vm460 = vcmp.le.f32.partialorder %v410, %v437
      %vm461 = vcmp.le.f32.partialorder %v411, %v439
      %vm462 = vcmp.le.f32.partialorder %v412, %v441
      %vm463 = vcmp.le.f32.partialorder %v413, %v443
      %vm464 = vcmp.le.f32.partialorder %v414, %v445
      %vm465 = vcmp.le.f32.partialorder %v415, %v447
      %vm466 = vcmp.le.f32.partialorder %v416, %v449
      %vm467 = vcmp.le.f32.partialorder %v417, %v451
      %v468 = vsel %vm452, %v419, 128
      %v469 = vsel %vm453, %v419, 128
      %v470 = vsel %vm454, %v419, 128
      %v471 = vsel %vm455, %v419, 128
      %v472 = vsel %vm456, %v419, 128
      %v473 = vsel %vm457, %v419, 128
      %v474 = vsel %vm458, %v419, 128
      %v475 = vsel %vm459, %v419, 128
      %v476 = vsel %vm460, %v419, 128
      %v477 = vsel %vm461, %v419, 128
      %v478 = vsel %vm462, %v419, 128
      %v479 = vsel %vm463, %v419, 128
      %v480 = vsel %vm464, %v419, 128
      %v481 = vsel %vm465, %v419, 128
      %v482 = vsel %vm466, %v419, 128
      %v483 = vsel %vm467, %v419, 128
      %v484 = vand.u32 %v468, 65535
      %v485 = vshra.s32 %v468, 16
      %v486 = vcvt.s32.f32 %v484
      %v487 = vcvt.s32.f32 %v485
      %488 = vmin.xlane.f32.xlu0 %v487
      %v489 = vpop.xlane.xlu0 %488
      %vm490 = vcmp.eq.f32.partialorder %v487, %v489
      %v491 = vsel %vm490, %v486, inf
      %492 = vmin.xlane.f32.xlu0 %v491
      %v493 = vpop.xlane.xlu0 %492
      %v494 = vcvt.f32.s32 %v493
      %v495 = vcvt.f32.s32 %v489
      %v496 = vshll.u32 %v495, 16
      %v497 = vadd.s32 %v496, %v494
      %v498 = vand.u32 %v469, 65535
      %v499 = vshra.s32 %v469, 16
      %v500 = vcvt.s32.f32 %v498
      %v501 = vcvt.s32.f32 %v499
      %502 = vmin.xlane.f32.xlu0 %v501
      %v503 = vpop.xlane.xlu0 %502
      %vm504 = vcmp.eq.f32.partialorder %v501, %v503
      %v505 = vsel %vm504, %v500, inf
      %506 = vmin.xlane.f32.xlu0 %v505
      %v507 = vpop.xlane.xlu0 %506
      %v508 = vcvt.f32.s32 %v507
      %v509 = vcvt.f32.s32 %v503
      %v510 = vshll.u32 %v509, 16
      %v511 = vadd.s32 %v510, %v508
      %v512 = vand.u32 %v470, 65535
      %v513 = vshra.s32 %v470, 16
      %v514 = vcvt.s32.f32 %v512
      %v515 = vcvt.s32.f32 %v513
      %516 = vmin.xlane.f32.xlu0 %v515
      %v517 = vpop.xlane.xlu0 %516
      %vm518 = vcmp.eq.f32.partialorder %v515, %v517
      %v519 = vsel %vm518, %v514, inf
      %520 = vmin.xlane.f32.xlu0 %v519
      %v521 = vpop.xlane.xlu0 %520
      %v522 = vcvt.f32.s32 %v521
      %v523 = vcvt.f32.s32 %v517
      %v524 = vshll.u32 %v523, 16
      %v525 = vadd.s32 %v524, %v522
      %v526 = vand.u32 %v471, 65535
      %v527 = vshra.s32 %v471, 16
      %v528 = vcvt.s32.f32 %v526
      %v529 = vcvt.s32.f32 %v527
      %530 = vmin.xlane.f32.xlu0 %v529
      %v531 = vpop.xlane.xlu0 %530
      %vm532 = vcmp.eq.f32.partialorder %v529, %v531
      %v533 = vsel %vm532, %v528, inf
      %534 = vmin.xlane.f32.xlu0 %v533
      %v535 = vpop.xlane.xlu0 %534
      %v536 = vcvt.f32.s32 %v535
      %v537 = vcvt.f32.s32 %v531
      %v538 = vshll.u32 %v537, 16
      %v539 = vadd.s32 %v538, %v536
      %v540 = vand.u32 %v472, 65535
      %v541 = vshra.s32 %v472, 16
      %v542 = vcvt.s32.f32 %v540
      %v543 = vcvt.s32.f32 %v541
      %544 = vmin.xlane.f32.xlu0 %v543
      %v545 = vpop.xlane.xlu0 %544
      %vm546 = vcmp.eq.f32.partialorder %v543, %v545
      %v547 = vsel %vm546, %v542, inf
      %548 = vmin.xlane.f32.xlu0 %v547
      %v549 = vpop.xlane.xlu0 %548
      %v550 = vcvt.f32.s32 %v549
      %v551 = vcvt.f32.s32 %v545
      %v552 = vshll.u32 %v551, 16
      %v553 = vadd.s32 %v552, %v550
      %v554 = vand.u32 %v473, 65535
      %v555 = vshra.s32 %v473, 16
      %v556 = vcvt.s32.f32 %v554
      %v557 = vcvt.s32.f32 %v555
      %558 = vmin.xlane.f32.xlu0 %v557
      %v559 = vpop.xlane.xlu0 %558
      %vm560 = vcmp.eq.f32.partialorder %v557, %v559
      %v561 = vsel %vm560, %v556, inf
      %562 = vmin.xlane.f32.xlu0 %v561
      %v563 = vpop.xlane.xlu0 %562
      %v564 = vcvt.f32.s32 %v563
      %v565 = vcvt.f32.s32 %v559
      %v566 = vshll.u32 %v565, 16
      %v567 = vadd.s32 %v566, %v564
      %v568 = vand.u32 %v474, 65535
      %v569 = vshra.s32 %v474, 16
      %v570 = vcvt.s32.f32 %v568
      %v571 = vcvt.s32.f32 %v569
      %572 = vmin.xlane.f32.xlu0 %v571
      %v573 = vpop.xlane.xlu0 %572
      %vm574 = vcmp.eq.f32.partialorder %v571, %v573
      %v575 = vsel %vm574, %v570, inf
      %576 = vmin.xlane.f32.xlu0 %v575
      %v577 = vpop.xlane.xlu0 %576
      %v578 = vcvt.f32.s32 %v577
      %v579 = vcvt.f32.s32 %v573
      %v580 = vshll.u32 %v579, 16
      %v581 = vadd.s32 %v580, %v578
      %v582 = vand.u32 %v475, 65535
      %v583 = vshra.s32 %v475, 16
      %v584 = vcvt.s32.f32 %v582
      %v585 = vcvt.s32.f32 %v583
      %586 = vmin.xlane.f32.xlu0 %v585
      %v587 = vpop.xlane.xlu0 %586
      %vm588 = vcmp.eq.f32.partialorder %v585, %v587
      %v589 = vsel %vm588, %v584, inf
      %590 = vmin.xlane.f32.xlu0 %v589
      %v591 = vpop.xlane.xlu0 %590
      %v592 = vcvt.f32.s32 %v591
      %v593 = vcvt.f32.s32 %v587
      %v594 = vshll.u32 %v593, 16
      %v595 = vadd.s32 %v594, %v592
      %v596 = vand.u32 %v476, 65535
      %v597 = vshra.s32 %v476, 16
      %v598 = vcvt.s32.f32 %v596
      %v599 = vcvt.s32.f32 %v597
      %600 = vmin.xlane.f32.xlu0 %v599
      %v601 = vpop.xlane.xlu0 %600
      %vm602 = vcmp.eq.f32.partialorder %v599, %v601
      %v603 = vsel %vm602, %v598, inf
      %604 = vmin.xlane.f32.xlu0 %v603
      %v605 = vpop.xlane.xlu0 %604
      %v606 = vcvt.f32.s32 %v605
      %v607 = vcvt.f32.s32 %v601
      %v608 = vshll.u32 %v607, 16
      %v609 = vadd.s32 %v608, %v606
      %v610 = vand.u32 %v477, 65535
      %v611 = vshra.s32 %v477, 16
      %v612 = vcvt.s32.f32 %v610
      %v613 = vcvt.s32.f32 %v611
      %614 = vmin.xlane.f32.xlu0 %v613
      %v615 = vpop.xlane.xlu0 %614
      %vm616 = vcmp.eq.f32.partialorder %v613, %v615
      %v617 = vsel %vm616, %v612, inf
      %618 = vmin.xlane.f32.xlu0 %v617
      %v619 = vpop.xlane.xlu0 %618
      %v620 = vcvt.f32.s32 %v619
      %v621 = vcvt.f32.s32 %v615
      %v622 = vshll.u32 %v621, 16
      %v623 = vadd.s32 %v622, %v620
      %v624 = vand.u32 %v478, 65535
      %v625 = vshra.s32 %v478, 16
      %v626 = vcvt.s32.f32 %v624
      %v627 = vcvt.s32.f32 %v625
      %628 = vmin.xlane.f32.xlu0 %v627
      %v629 = vpop.xlane.xlu0 %628
      %vm630 = vcmp.eq.f32.partialorder %v627, %v629
      %v631 = vsel %vm630, %v626, inf
      %632 = vmin.xlane.f32.xlu0 %v631
      %v633 = vpop.xlane.xlu0 %632
      %v634 = vcvt.f32.s32 %v633
      %v635 = vcvt.f32.s32 %v629
      %v636 = vshll.u32 %v635, 16
      %v637 = vadd.s32 %v636, %v634
      %v638 = vand.u32 %v479, 65535
      %v639 = vshra.s32 %v479, 16
      %v640 = vcvt.s32.f32 %v638
      %v641 = vcvt.s32.f32 %v639
      %642 = vmin.xlane.f32.xlu0 %v641
      %v643 = vpop.xlane.xlu0 %642
      %vm644 = vcmp.eq.f32.partialorder %v641, %v643
      %v645 = vsel %vm644, %v640, inf
      %646 = vmin.xlane.f32.xlu0 %v645
      %v647 = vpop.xlane.xlu0 %646
      %v648 = vcvt.f32.s32 %v647
      %v649 = vcvt.f32.s32 %v643
      %v650 = vshll.u32 %v649, 16
      %v651 = vadd.s32 %v650, %v648
      %v652 = vand.u32 %v480, 65535
      %v653 = vshra.s32 %v480, 16
      %v654 = vcvt.s32.f32 %v652
      %v655 = vcvt.s32.f32 %v653
      %656 = vmin.xlane.f32.xlu0 %v655
      %v657 = vpop.xlane.xlu0 %656
      %vm658 = vcmp.eq.f32.partialorder %v655, %v657
      %v659 = vsel %vm658, %v654, inf
      %660 = vmin.xlane.f32.xlu0 %v659
      %v661 = vpop.xlane.xlu0 %660
      %v662 = vcvt.f32.s32 %v661
      %v663 = vcvt.f32.s32 %v657
      %v664 = vshll.u32 %v663, 16
      %v665 = vadd.s32 %v664, %v662
      %v666 = vand.u32 %v481, 65535
      %v667 = vshra.s32 %v481, 16
      %v668 = vcvt.s32.f32 %v666
      %v669 = vcvt.s32.f32 %v667
      %670 = vmin.xlane.f32.xlu0 %v669
      %v671 = vpop.xlane.xlu0 %670
      %vm672 = vcmp.eq.f32.partialorder %v669, %v671
      %v673 = vsel %vm672, %v668, inf
      %674 = vmin.xlane.f32.xlu0 %v673
      %v675 = vpop.xlane.xlu0 %674
      %v676 = vcvt.f32.s32 %v675
      %v677 = vcvt.f32.s32 %v671
      %v678 = vshll.u32 %v677, 16
      %v679 = vadd.s32 %v678, %v676
      %v680 = vand.u32 %v482, 65535
      %v681 = vshra.s32 %v482, 16
      %v682 = vcvt.s32.f32 %v680
      %v683 = vcvt.s32.f32 %v681
      %684 = vmin.xlane.f32.xlu0 %v683
      %v685 = vpop.xlane.xlu0 %684
      %vm686 = vcmp.eq.f32.partialorder %v683, %v685
      %v687 = vsel %vm686, %v682, inf
      %688 = vmin.xlane.f32.xlu0 %v687
      %v689 = vpop.xlane.xlu0 %688
      %v690 = vcvt.f32.s32 %v689
      %v691 = vcvt.f32.s32 %v685
      %v692 = vshll.u32 %v691, 16
      %v693 = vadd.s32 %v692, %v690
      %v694 = vand.u32 %v483, 65535
      %v695 = vshra.s32 %v483, 16
      %v696 = vcvt.s32.f32 %v694
      %v697 = vcvt.s32.f32 %v695
      %698 = vmin.xlane.f32.xlu0 %v697
      %v699 = vpop.xlane.xlu0 %698
      %vm700 = vcmp.eq.f32.partialorder %v697, %v699
      %v701 = vsel %vm700, %v696, inf
      %702 = vmin.xlane.f32.xlu0 %v701
      %v703 = vpop.xlane.xlu0 %702
      %v704 = vcvt.f32.s32 %v703
      %v705 = vcvt.f32.s32 %v699
      %v706 = vshll.u32 %v705, 16
      %v707 = vadd.s32 %v706, %v704
      %708 = vst [vmem:[%s277] sm:$0xff] %v497
      %709 = vst [vmem:[%s277 + $0x8] sm:$0xff] %v511
      %710 = vst [vmem:[%s277 + $0x10] sm:$0xff] %v525
      %711 = vst [vmem:[%s277 + $0x18] sm:$0xff] %v539
      %712 = vst [vmem:[%s277 + $0x20] sm:$0xff] %v553
      %713 = vst [vmem:[%s277 + $0x28] sm:$0xff] %v567
      %714 = vst [vmem:[%s277 + $0x30] sm:$0xff] %v581
      %715 = vst [vmem:[%s277 + $0x38] sm:$0xff] %v595
      %716 = vst [vmem:[%s277 + $0x40] sm:$0xff] %v609
      %717 = vst [vmem:[%s277 + $0x48] sm:$0xff] %v623
      %718 = vst [vmem:[%s277 + $0x50] sm:$0xff] %v637
      %719 = vst [vmem:[%s277 + $0x58] sm:$0xff] %v651
      %720 = vst [vmem:[%s277 + $0x60] sm:$0xff] %v665
      %721 = vst [vmem:[%s277 + $0x68] sm:$0xff] %v679
      %722 = vst [vmem:[%s277 + $0x70] sm:$0xff] %v693
      %723 = vst [vmem:[%s277 + $0x78] sm:$0xff] %v707
      %vm724 = vcmp.eq.s32.totalorder %v419, %v497
      %vm725 = vcmp.eq.s32.totalorder %v419, %v511
      %vm726 = vcmp.eq.s32.totalorder %v419, %v525
      %vm727 = vcmp.eq.s32.totalorder %v419, %v539
      %vm728 = vcmp.eq.s32.totalorder %v419, %v553
      %vm729 = vcmp.eq.s32.totalorder %v419, %v567
      %vm730 = vcmp.eq.s32.totalorder %v419, %v581
      %vm731 = vcmp.eq.s32.totalorder %v419, %v595
      %vm732 = vcmp.eq.s32.totalorder %v419, %v609
      %vm733 = vcmp.eq.s32.totalorder %v419, %v623
      %vm734 = vcmp.eq.s32.totalorder %v419, %v637
      %vm735 = vcmp.eq.s32.totalorder %v419, %v651
      %vm736 = vcmp.eq.s32.totalorder %v419, %v665
      %vm737 = vcmp.eq.s32.totalorder %v419, %v679
      %vm738 = vcmp.eq.s32.totalorder %v419, %v693
      %vm739 = vcmp.eq.s32.totalorder %v419, %v707
      %v740 = vsel %vm724, 1, 0
      %v741 = vsel %vm725, 1, 0
      %v742 = vsel %vm726, 1, 0
      %v743 = vsel %vm727, 1, 0
      %v744 = vsel %vm728, 1, 0
      %v745 = vsel %vm729, 1, 0
      %v746 = vsel %vm730, 1, 0
      %v747 = vsel %vm731, 1, 0
      %v748 = vsel %vm732, 1, 0
      %v749 = vsel %vm733, 1, 0
      %v750 = vsel %vm734, 1, 0
      %v751 = vsel %vm735, 1, 0
      %v752 = vsel %vm736, 1, 0
      %v753 = vsel %vm737, 1, 0
      %v754 = vsel %vm738, 1, 0
      %v755 = vsel %vm739, 1, 0
      %v756 = vcvt.s32.f32 %v740
      %v757 = vcvt.s32.f32 %v741
      %v758 = vcvt.s32.f32 %v742
      %v759 = vcvt.s32.f32 %v743
      %v760 = vcvt.s32.f32 %v744
      %v761 = vcvt.s32.f32 %v745
      %v762 = vcvt.s32.f32 %v746
      %v763 = vcvt.s32.f32 %v747
      %v764 = vcvt.s32.f32 %v748
      %v765 = vcvt.s32.f32 %v749
      %v766 = vcvt.s32.f32 %v750
      %v767 = vcvt.s32.f32 %v751
      %v768 = vcvt.s32.f32 %v752
      %v769 = vcvt.s32.f32 %v753
      %v770 = vcvt.s32.f32 %v754
      %v771 = vcvt.s32.f32 %v755
      %772 = vmatpush.msra.mxu0 %v316
      %773 = vmatpush.msra.mxu0 %v315
      %774 = vmatpush.msra.mxu0 %v314
      %775 = vmatpush.msra.mxu0 %v313
      %776 = vmatpush.msra.mxu0 %v312
      %777 = vmatpush.msra.mxu0 %v311
      %778 = vmatpush.msra.mxu0 %v310
      %779 = vmatpush.msra.mxu0 %v309
      %780 = vmatpush.msra.mxu0 %v308
      %781 = vmatpush.msra.mxu0 %v307
      %782 = vmatpush.msra.mxu0 %v306
      %783 = vmatpush.msra.mxu0 %v305
      %784 = vmatpush.msra.mxu0 %v304
      %785 = vmatpush.msra.mxu0 %v303
      %786 = vmatpush.msra.mxu0 %v302
      %787 = vmatpush.msra.mxu0 %v301
      %788 = vmatmul.f32.gmra.mxu0 %v756
      %v789 = vpop.f32.mrf.mxu0
      %v790 = vadd.f32 0.0, %v789
      %791 = vmatmul.f32.gmra.mxu0 %v757
      %v792 = vpop.f32.mrf.mxu0
      %v793 = vadd.f32 0.0, %v792
      %794 = vmatmul.f32.gmra.mxu0 %v758
      %v795 = vpop.f32.mrf.mxu0
      %v796 = vadd.f32 0.0, %v795
      %797 = vmatmul.f32.gmra.mxu0 %v759
      %v798 = vpop.f32.mrf.mxu0
      %v799 = vadd.f32 0.0, %v798
      %800 = vmatmul.f32.gmra.mxu0 %v760
      %v801 = vpop.f32.mrf.mxu0
      %v802 = vadd.f32 0.0, %v801
      %803 = vmatmul.f32.gmra.mxu0 %v761
      %v804 = vpop.f32.mrf.mxu0
      %v805 = vadd.f32 0.0, %v804
      %806 = vmatmul.f32.gmra.mxu0 %v762
      %v807 = vpop.f32.mrf.mxu0
      %v808 = vadd.f32 0.0, %v807
      %809 = vmatmul.f32.gmra.mxu0 %v763
      %v810 = vpop.f32.mrf.mxu0
      %v811 = vadd.f32 0.0, %v810
      %812 = vmatmul.f32.gmra.mxu0 %v764
      %v813 = vpop.f32.mrf.mxu0
      %v814 = vadd.f32 0.0, %v813
      %815 = vmatmul.f32.gmra.mxu0 %v765
      %v816 = vpop.f32.mrf.mxu0
      %v817 = vadd.f32 0.0, %v816
      %818 = vmatmul.f32.gmra.mxu0 %v766
      %v819 = vpop.f32.mrf.mxu0
      %v820 = vadd.f32 0.0, %v819
      %821 = vmatmul.f32.gmra.mxu0 %v767
      %v822 = vpop.f32.mrf.mxu0
      %v823 = vadd.f32 0.0, %v822
      %824 = vmatmul.f32.gmra.mxu0 %v768
      %v825 = vpop.f32.mrf.mxu0
      %v826 = vadd.f32 0.0, %v825
      %827 = vmatmul.f32.gmra.mxu0 %v769
      %v828 = vpop.f32.mrf.mxu0
      %v829 = vadd.f32 0.0, %v828
      %830 = vmatmul.f32.gmra.mxu0 %v770
      %v831 = vpop.f32.mrf.mxu0
      %v832 = vadd.f32 0.0, %v831
      %833 = vmatmul.f32.gmra.mxu0 %v771
      %v834 = vpop.f32.mrf.mxu0
      %v835 = vadd.f32 0.0, %v834
      %836 = vdwg.mxu0
      %837 = vst [vmem:[%s271] sm:$0xff] %v790
      %838 = vst [vmem:[%s271 + $0x8] sm:$0xff] %v793
      %839 = vst [vmem:[%s271 + $0x10] sm:$0xff] %v796
      %840 = vst [vmem:[%s271 + $0x18] sm:$0xff] %v799
      %841 = vst [vmem:[%s271 + $0x20] sm:$0xff] %v802
      %842 = vst [vmem:[%s271 + $0x28] sm:$0xff] %v805
      %843 = vst [vmem:[%s271 + $0x30] sm:$0xff] %v808
      %844 = vst [vmem:[%s271 + $0x38] sm:$0xff] %v811
      %845 = vst [vmem:[%s271 + $0x40] sm:$0xff] %v814
      %846 = vst [vmem:[%s271 + $0x48] sm:$0xff] %v817
      %847 = vst [vmem:[%s271 + $0x50] sm:$0xff] %v820
      %848 = vst [vmem:[%s271 + $0x58] sm:$0xff] %v823
      %849 = vst [vmem:[%s271 + $0x60] sm:$0xff] %v826
      %850 = vst [vmem:[%s271 + $0x68] sm:$0xff] %v829
      %851 = vst [vmem:[%s271 + $0x70] sm:$0xff] %v832
      %852 = vst [vmem:[%s271 + $0x78] sm:$0xff] %v835
      %v853 = vsub.f32 %v790, %v285
      %v854 = vsub.f32 %v793, %v286
      %v855 = vsub.f32 %v796, %v287
      %v856 = vsub.f32 %v799, %v288
      %v857 = vsub.f32 %v802, %v289
      %v858 = vsub.f32 %v805, %v290
      %v859 = vsub.f32 %v808, %v291
      %v860 = vsub.f32 %v811, %v292
      %v861 = vsub.f32 %v814, %v293
      %v862 = vsub.f32 %v817, %v294
      %v863 = vsub.f32 %v820, %v295
      %v864 = vsub.f32 %v823, %v296
      %v865 = vsub.f32 %v826, %v297
      %v866 = vsub.f32 %v829, %v298
      %v867 = vsub.f32 %v832, %v299
      %v868 = vsub.f32 %v835, %v300
      %v869 = vmul.f32 %v853, %v853
      %v870 = vmul.f32 %v854, %v854
      %v871 = vmul.f32 %v855, %v855
      %v872 = vmul.f32 %v856, %v856
      %v873 = vmul.f32 %v857, %v857
      %v874 = vmul.f32 %v858, %v858
      %v875 = vmul.f32 %v859, %v859
      %v876 = vmul.f32 %v860, %v860
      %v877 = vmul.f32 %v861, %v861
      %v878 = vmul.f32 %v862, %v862
      %v879 = vmul.f32 %v863, %v863
      %v880 = vmul.f32 %v864, %v864
      %v881 = vmul.f32 %v865, %v865
      %v882 = vmul.f32 %v866, %v866
      %v883 = vmul.f32 %v867, %v867
      %v884 = vmul.f32 %v868, %v868
      %v885 = vadd.f32 %v869, %v870
      %v886 = vadd.f32 %v885, %v871
      %v887 = vadd.f32 %v886, %v872
      %v888 = vadd.f32 %v887, %v873
      %v889 = vadd.f32 %v888, %v874
      %v890 = vadd.f32 %v889, %v875
      %v891 = vadd.f32 %v890, %v876
      %v892 = vadd.f32 %v891, %v877
      %v893 = vadd.f32 %v892, %v878
      %v894 = vadd.f32 %v893, %v879
      %v895 = vadd.f32 %v894, %v880
      %v896 = vadd.f32 %v895, %v881
      %v897 = vadd.f32 %v896, %v882
      %v898 = vadd.f32 %v897, %v883
      %v899 = vadd.f32 %v898, %v884
      %900 = vadd.xlane.f32.xlu0 %v899
      %v901 = vpop.xlane.xlu0 %900
      %v902 = vrot.slane %v901, 4
      %v903 = vadd.f32 %v901, %v902
      %v904 = vrot.slane %v903, 2
      %v905 = vadd.f32 %v903, %v904
      %v906 = vrot.slane %v905, 1
      %v907 = vadd.f32 %v905, %v906
      %s908 = vtos %v907
      %v909 = vadd.f32 %v756, %v757
      %v910 = vadd.f32 %v909, %v758
      %v911 = vadd.f32 %v910, %v759
      %v912 = vadd.f32 %v911, %v760
      %v913 = vadd.f32 %v912, %v761
      %v914 = vadd.f32 %v913, %v762
      %v915 = vadd.f32 %v914, %v763
      %v916 = vadd.f32 %v915, %v764
      %v917 = vadd.f32 %v916, %v765
      %v918 = vadd.f32 %v917, %v766
      %v919 = vadd.f32 %v918, %v767
      %v920 = vadd.f32 %v919, %v768
      %v921 = vadd.f32 %v920, %v769
      %v922 = vadd.f32 %v921, %v770
      %v923 = vadd.f32 %v922, %v771
      %v924 = vrot.slane %v923, 4
      %v925 = vadd.f32 %v923, %v924
      %v926 = vrot.slane %v925, 2
      %v927 = vadd.f32 %v925, %v926
      %v928 = vrot.slane %v927, 1
      %v929 = vadd.f32 %v927, %v928
      %v930 = vstv %s908
      %931 = vst [vmem:[%s281] sm:$0x1] %v930
      %932 = vst [vmem:[%s284] sm:$0x1] %v929
      %s933 = smul.u32 16, %s18
      %p934 = scmp.lt.s32.totalorder %s933, 63
      %s935 = scalar_select %p934, %s933, 63
      %s936 = smul.addr %s935, 8
      %s937 = scalar_lea.vmem %s3, %s936
      %s938 = smul.u32 16, %s18
      %p939 = scmp.lt.s32.totalorder %s938, 63
      %s940 = scalar_select %p939, %s938, 63
      %s941 = smul.addr %s940, 8
      %s942 = scalar_lea.vmem %s4, %s941
      %p943 = scmp.lt.s32.totalorder %s18, 3
      %s944 = scalar_select %p943, %s18, 3
      %s945 = scalar_lea.vmem %s5, %s944
      %p946 = scmp.lt.s32.totalorder %s18, 3
      %s947 = scalar_select %p946, %s18, 3
      %s948 = scalar_lea.vmem %s6, %s947
      // Predicated region
      $region33: #{vector_quantizer_forward.1} parent=31 // pred_check
        %p949 = pneg %p104
      $region34: #{vector_quantizer_forward.1} parent=31 // pred_check_branch
        %951 = sbr.rel (%p949) target = $region36
      $region35: #{vector_quantizer_forward.1} parent=31 // pred_region
        %s952 = smul.u32 16, %s18
      $region36: #{vector_quantizer_forward.1} parent=31 // pred_fallthru
        _
      // Predicated region
      $region37: #{vector_quantizer_forward.1} parent=31 // pred_check
        %p953 = pneg %p130
      $region38: #{vector_quantizer_forward.1} parent=31 // pred_check_branch
        %955 = sbr.rel (%p953) target = $region40
      $region39: #{vector_quantizer_forward.1} parent=31 // pred_region
        %s956 = smul.u32 16, %s18
      $region40: #{vector_quantizer_forward.1} parent=31 // pred_fallthru
        _
      // Predicated region
      $region41: #{vector_quantizer_forward.1} parent=31 // pred_check
        %p957 = pneg %p156
      $region42: #{vector_quantizer_forward.1} parent=31 // pred_check_branch
        %959 = sbr.rel (%p957) target = $region44
      $region43: #{vector_quantizer_forward.1} parent=31 // pred_region
        _
      $region44: #{vector_quantizer_forward.1} parent=31 // pred_fallthru
        _
      // Predicated region
      $region45: #{vector_quantizer_forward.1} parent=31 // pred_check
        %p960 = pneg %p182
      $region46: #{vector_quantizer_forward.1} parent=31 // pred_check_branch
        %962 = sbr.rel (%p960) target = $region48
      $region47: #{vector_quantizer_forward.1} parent=31 // pred_region
        _
      $region48: #{vector_quantizer_forward.1} parent=31 // pred_fallthru
        _
    $region32: #{vector_quantizer_forward.1} parent=5 // pred_fallthru
      _
    %p963 = scmp.le.s32.totalorder 2, %s13
    // Predicated region
    $region49: #{vector_quantizer_forward.1} parent=5 // pred_check
      %p964 = pneg %p963
    $region50: #{vector_quantizer_forward.1} parent=5 // pred_check_branch
      %966 = sbr.rel (%p964) target = $region52
    $region51: #{vector_quantizer_forward.1} parent=5 // pred_region
      %s967 = ssub.s32 %s13, 2
      // Predicated region
      $region53: #{vector_quantizer_forward.1} parent=51 // pred_check
        %p968 = pneg %p110
      $region54: #{vector_quantizer_forward.1} parent=51 // pred_check_branch
        %970 = sbr.rel (%p968) target = $region56
      $region55: #{vector_quantizer_forward.1} parent=51 // pred_region
        %s971 = smul.u32 16, %s19
        %p972 = scmp.lt.s32.totalorder %s971, 63
        %s973 = scalar_select %p972, %s971, 63
        %s974 = smul.addr %s973, 8
        %s975 = scalar_lea.vmem %s3, %s974
      $region56: #{vector_quantizer_forward.1} parent=51 // pred_fallthru
        _
      // Predicated region
      $region57: #{vector_quantizer_forward.1} parent=51 // pred_check
        %p976 = pneg %p136
      $region58: #{vector_quantizer_forward.1} parent=51 // pred_check_branch
        %978 = sbr.rel (%p976) target = $region60
      $region59: #{vector_quantizer_forward.1} parent=51 // pred_region
        %s979 = smul.u32 16, %s19
        %p980 = scmp.lt.s32.totalorder %s979, 63
        %s981 = scalar_select %p980, %s979, 63
        %s982 = smul.addr %s981, 8
        %s983 = scalar_lea.vmem %s4, %s982
      $region60: #{vector_quantizer_forward.1} parent=51 // pred_fallthru
        _
      // Predicated region
      $region61: #{vector_quantizer_forward.1} parent=51 // pred_check
        %p984 = pneg %p162
      $region62: #{vector_quantizer_forward.1} parent=51 // pred_check_branch
        %986 = sbr.rel (%p984) target = $region64
      $region63: #{vector_quantizer_forward.1} parent=51 // pred_region
        %p987 = scmp.lt.s32.totalorder %s19, 3
        %s988 = scalar_select %p987, %s19, 3
        %s989 = scalar_lea.vmem %s5, %s988
      $region64: #{vector_quantizer_forward.1} parent=51 // pred_fallthru
        _
      // Predicated region
      $region65: #{vector_quantizer_forward.1} parent=51 // pred_check
        %p990 = pneg %p188
      $region66: #{vector_quantizer_forward.1} parent=51 // pred_check_branch
        %992 = sbr.rel (%p990) target = $region68
      $region67: #{vector_quantizer_forward.1} parent=51 // pred_region
        %p993 = scmp.lt.s32.totalorder %s19, 3
        %s994 = scalar_select %p993, %s19, 3
        %s995 = scalar_lea.vmem %s6, %s994
      $region68: #{vector_quantizer_forward.1} parent=51 // pred_fallthru
        _
    $region52: #{vector_quantizer_forward.1} parent=5 // pred_fallthru
      _
  $region6: #{vector_quantizer_forward.1} parent=0 // loop_footer
    %s17 = sadd.s32 1, %s13
  $region7: #{vector_quantizer_forward.1} parent=0 // loop_footer_branch
    %12 = sbr.rel target = $region3
  $region8: #{vector_quantizer_forward.1} parent=0 // loop_exit
    _

</llo_original>
